<compile_context>
chip_gen: v6e
topology: v6e:2x2x1
jax: 0.10.0
libtpu: 0.0.40
codegen_flags: <defaults>
</compile_context>

<pallas_src>
import jax
import jax.numpy as jnp
from jax.experimental import pallas as pl
from jax.experimental.pallas import tpu as pltpu

# ----------------------------- model dimensions -----------------------------
OBS_DIM = 32      # extractor input dim
HID = 64          # extractor hidden / output_dim
ACT_DIM = 8       # action_dim
BATCH = 16        # demo batch
LANE = 128        # TPU lane width; hidden dims zero-padded to this


# --------------------------------- kernel -----------------------------------
def ppo_actor_kernel(obs_ref, w1_ref, w2_ref, wo_ref, b12_ref, bo_ref, out_ref):
    """Fused extractor-MLP + linear head + softmax over ACT_DIM lanes."""
    obs = obs_ref[...]                     # (TB, OBS_DIM) bf16 (preprocess_obs)
    b12 = b12_ref[...]                     # (2, LANE) f32 hidden biases

    # extractor layer 1: Linear + ReLU  (padded weight cols are zero)
    h1 = jnp.dot(obs, w1_ref[...], preferred_element_type=jnp.float32)
    h1 = jnp.maximum(h1 + b12[0:1, :], 0.0)

    # extractor layer 2: Linear + ReLU -> feature (output_dim = HID)
    h2 = jnp.dot(h1.astype(jnp.bfloat16), w2_ref[...],
                 preferred_element_type=jnp.float32)
    feature = jnp.maximum(h2 + b12[1:2, :], 0.0)

    # layer_out: Linear(output_dim, action_dim) + Softmax(dim=-1)
    logits = jnp.dot(feature.astype(jnp.bfloat16), wo_ref[...],
                     preferred_element_type=jnp.float32)
    logits = logits + bo_ref[...]          # (TB, ACT_DIM) + (1, ACT_DIM)

    m = jnp.max(logits, axis=-1, keepdims=True)
    e = jnp.exp(logits - m)
    out_ref[...] = (e / jnp.sum(e, axis=-1, keepdims=True)).astype(out_ref.dtype)


# -------------------------------- wrapper ------------------------------------
def _round_up(x, m):
    return ((x + m - 1) // m) * m


def _choose_tb(B):
    """Batch-tile: >=2 grid steps when possible (v7x 2-TC sharding), big tiles
    for large rollout batches (HBM roofline), v5e-specific cap for VMEM."""
    kind = ""
    try:
        kind = jax.devices()[0].device_kind.lower()
    except Exception:
        pass
    tb_max = 1024 if "v5" in kind else 2048
    b8 = _round_up(B, 8)
    return max(8, min(tb_max, _round_up(pl.cdiv(b8, 2), 8)))


def pack_params(params):
    """Zero-pad hidden dims to 128 lanes, cast weights to bf16, pack biases."""
    w1, b1, w2, b2, wo, bo = params
    w1_p = jnp.zeros((OBS_DIM, LANE), jnp.float32).at[:, :HID].set(w1)
    w2_p = jnp.zeros((LANE, LANE), jnp.float32).at[:HID, :HID].set(w2)
    wo_p = jnp.zeros((LANE, ACT_DIM), jnp.float32).at[:HID, :].set(wo)
    b12_p = (jnp.zeros((2, LANE), jnp.float32)
             .at[0, :HID].set(b1[0])
             .at[1, :HID].set(b2[0]))
    bo_p = bo.reshape(1, ACT_DIM).astype(jnp.float32)
    return (w1_p.astype(jnp.bfloat16),
            w2_p.astype(jnp.bfloat16),
            wo_p.astype(jnp.bfloat16),
            b12_p, bo_p)


def ppo_actor_forward(obs, packed_params, state=None):
    """Mirrors PPOActor.forward: returns (softmax_probs, state)."""
    w1_p, w2_p, wo_p, b12_p, bo_p = packed_params
    B = obs.shape[0]

    TB = _choose_tb(B)
    Bp = _round_up(B, TB)

    # preprocess_obs: cast.  TODO(synk): in production the rollout producer
    # should emit bf16 obs directly so this cast disappears entirely.
    obs_b = obs.astype(jnp.bfloat16)
    if Bp != B:
        obs_b = jnp.pad(obs_b, ((0, Bp - B), (0, 0)))

    grid = (Bp // TB,)

    out = pl.pallas_call(
        ppo_actor_kernel,
        out_shape=jax.ShapeDtypeStruct((Bp, ACT_DIM), jnp.float32),
        grid_spec=pltpu.PrefetchScalarGridSpec(
            num_scalar_prefetch=0,
            grid=grid,
            in_specs=[
                pl.BlockSpec((TB, OBS_DIM), lambda i: (i, 0)),     # obs tile
                pl.BlockSpec((OBS_DIM, LANE), lambda i: (0, 0)),   # w1 (resident)
                pl.BlockSpec((LANE, LANE), lambda i: (0, 0)),      # w2 (resident)
                pl.BlockSpec((LANE, ACT_DIM), lambda i: (0, 0)),   # w_out (resident)
                pl.BlockSpec((2, LANE), lambda i: (0, 0)),         # hidden biases
                pl.BlockSpec((1, ACT_DIM), lambda i: (0, 0)),      # output bias
            ],
            out_specs=pl.BlockSpec((TB, ACT_DIM), lambda i: (i, 0)),
        ),
        compiler_params=pltpu.CompilerParams(
            dimension_semantics=("parallel",)),
    )(obs_b, w1_p, w2_p, wo_p, b12_p, bo_p)

    probs = out if Bp == B else out[:B]
    return probs, state


# --------------------------- deterministic params ----------------------------
def init_params():
    key = jax.random.PRNGKey(0)
    k1, k2, k3, k4, k5, k6 = jax.random.split(key, 6)

    # PyTorch-style uniform(-1/sqrt(fan_in), 1/sqrt(fan_in)) init
    def lin(kw, kb, fan_in, fan_out):
        bound = 1.0 / jnp.sqrt(fan_in)
        w = jax.random.uniform(kw, (fan_in, fan_out), jnp.float32, -bound, bound)
        b = jax.random.uniform(kb, (1, fan_out), jnp.float32, -bound, bound)
        return w, b

    w1, b1 = lin(k1, k2, OBS_DIM, HID)
    w2, b2 = lin(k3, k4, HID, HID)
    wo, bo = lin(k5, k6, HID, ACT_DIM)
    return (w1, b1, w2, b2, wo, bo)


# --------------------------------- reference ---------------------------------
def ppo_actor_ref(obs, params):
    w1, b1, w2, b2, wo, bo = params
    h1 = jnp.maximum(obs.astype(jnp.float32) @ w1 + b1, 0.0)
    feat = jnp.maximum(h1 @ w2 + b2, 0.0)
    logits = feat @ wo + bo
    return jax.nn.softmax(logits, axis=-1)


if __name__ == "__main__":
    key = jax.random.PRNGKey(0)
    obs = jax.random.normal(jax.random.fold_in(key, 123), (BATCH, OBS_DIM),
                            dtype=jnp.float32)
    params = init_params()
    packed = pack_params(params)

    fwd = jax.jit(ppo_actor_forward)
    probs, state = fwd(obs, packed, None)
    probs = jax.block_until_ready(probs)

    ref = ppo_actor_ref(obs, params)
    assert probs.shape == (BATCH, ACT_DIM)
    # Exact division -> rows sum to 1 within f32 rounding.
    assert jnp.allclose(jnp.sum(probs, axis=-1), 1.0, atol=1e-5)
    # bf16 weights/activations on the MXU vs. pure-f32 reference.
    assert jnp.allclose(probs, ref, atol=2e-2, rtol=2e-2)
    assert state is None

    print("KERNEL_OK")
</pallas_src>

<mosaic_0001>
module attributes {stable_mosaic.version = 11 : i64} {
  func.func @ppo_actor_kernel(%arg0: i32, %arg1: memref<8x32xbf16, #tpu.memory_space<vmem>>, %arg2: memref<32x128xbf16, #tpu.memory_space<vmem>>, %arg3: memref<128x128xbf16, #tpu.memory_space<vmem>>, %arg4: memref<128x8xbf16, #tpu.memory_space<vmem>>, %arg5: memref<2x128xf32, #tpu.memory_space<vmem>>, %arg6: memref<1x8xf32, #tpu.memory_space<vmem>>, %arg7: memref<8x8xf32, #tpu.memory_space<vmem>>) attributes {dimension_semantics = [#tpu.dimension_semantics<parallel>], iteration_bounds = array<i64: 2>, scalar_prefetch = 0 : i64, scratch_operands = 0 : i64, tpu.core_type = #tpu.core_type<tc>, window_params = [{transform_indices = @transform_0, window_bounds = array<i64: 8, 32>}, {pipeline_mode = #tpu.pipeline_mode<synchronous>, transform_indices = @transform_1, window_bounds = array<i64: 32, 128>}, {pipeline_mode = #tpu.pipeline_mode<synchronous>, transform_indices = @transform_2, window_bounds = array<i64: 128, 128>}, {pipeline_mode = #tpu.pipeline_mode<synchronous>, transform_indices = @transform_3, window_bounds = array<i64: 128, 8>}, {pipeline_mode = #tpu.pipeline_mode<synchronous>, transform_indices = @transform_4, window_bounds = array<i64: 2, 128>}, {pipeline_mode = #tpu.pipeline_mode<synchronous>, transform_indices = @transform_5, window_bounds = array<i64: 1, 8>}, {transform_indices = @transform_6, window_bounds = array<i64: 8, 8>}]} {
    %c0 = arith.constant 0 : index
    %c0_0 = arith.constant 0 : index
    %0 = vector.load %arg1[%c0, %c0_0] : memref<8x32xbf16, #tpu.memory_space<vmem>>, vector<8x32xbf16>
    %c0_1 = arith.constant 0 : index
    %c0_2 = arith.constant 0 : index
    %1 = vector.load %arg5[%c0_1, %c0_2] : memref<2x128xf32, #tpu.memory_space<vmem>>, vector<2x128xf32>
    %c0_3 = arith.constant 0 : index
    %c0_4 = arith.constant 0 : index
    %2 = vector.load %arg2[%c0_3, %c0_4] : memref<32x128xbf16, #tpu.memory_space<vmem>>, vector<32x128xbf16>
    %cst = arith.constant dense<0.000000e+00> : vector<8x128xf32>
    %3 = tpu.matmul %0, %2, %cst {dimension_numbers = #tpu.dot_dimension_numbers<[1], [0], [0], [1], [0, 0, 1, 1], [], []>} : vector<8x32xbf16>, vector<32x128xbf16>, vector<8x128xf32> -> vector<8x128xf32>
    %4 = vector.extract_strided_slice %1 {offsets = [0, 0], sizes = [1, 128], strides = [1, 1]} : vector<2x128xf32> to vector<1x128xf32>
    %5 = vector.broadcast %4 : vector<1x128xf32> to vector<8x128xf32>
    %6 = arith.addf %3, %5 : vector<8x128xf32>
    %cst_5 = arith.constant 0.000000e+00 : f32
    %7 = vector.broadcast %cst_5 : f32 to vector<8x128xf32>
    %8 = arith.maximumf %6, %7 : vector<8x128xf32>
    %9 = arith.truncf %8 : vector<8x128xf32> to vector<8x128xbf16>
    %c0_6 = arith.constant 0 : index
    %c0_7 = arith.constant 0 : index
    %10 = vector.load %arg3[%c0_6, %c0_7] : memref<128x128xbf16, #tpu.memory_space<vmem>>, vector<128x128xbf16>
    %cst_8 = arith.constant dense<0.000000e+00> : vector<8x128xf32>
    %11 = tpu.matmul %9, %10, %cst_8 {dimension_numbers = #tpu.dot_dimension_numbers<[1], [0], [0], [1], [0, 0, 1, 1], [], []>} : vector<8x128xbf16>, vector<128x128xbf16>, vector<8x128xf32> -> vector<8x128xf32>
    %12 = vector.extract_strided_slice %1 {offsets = [1, 0], sizes = [1, 128], strides = [1, 1]} : vector<2x128xf32> to vector<1x128xf32>
    %13 = vector.broadcast %12 : vector<1x128xf32> to vector<8x128xf32>
    %14 = arith.addf %11, %13 : vector<8x128xf32>
    %cst_9 = arith.constant 0.000000e+00 : f32
    %15 = vector.broadcast %cst_9 : f32 to vector<8x128xf32>
    %16 = arith.maximumf %14, %15 : vector<8x128xf32>
    %17 = arith.truncf %16 : vector<8x128xf32> to vector<8x128xbf16>
    %c0_10 = arith.constant 0 : index
    %c0_11 = arith.constant 0 : index
    %18 = vector.load %arg4[%c0_10, %c0_11] : memref<128x8xbf16, #tpu.memory_space<vmem>>, vector<128x8xbf16>
    %cst_12 = arith.constant dense<0.000000e+00> : vector<8x8xf32>
    %19 = tpu.matmul %17, %18, %cst_12 {dimension_numbers = #tpu.dot_dimension_numbers<[1], [0], [0], [1], [0, 0, 1, 1], [], []>} : vector<8x128xbf16>, vector<128x8xbf16>, vector<8x8xf32> -> vector<8x8xf32>
    %c0_13 = arith.constant 0 : index
    %c0_14 = arith.constant 0 : index
    %20 = vector.load %arg6[%c0_13, %c0_14] : memref<1x8xf32, #tpu.memory_space<vmem>>, vector<1x8xf32>
    %21 = vector.broadcast %20 : vector<1x8xf32> to vector<8x8xf32>
    %22 = arith.addf %19, %21 : vector<8x8xf32>
    %cst_15 = arith.constant dense<0xFF800000> : vector<8xf32>
    %23 = vector.multi_reduction <maximumf>, %22, %cst_15 [1] : vector<8x8xf32> to vector<8xf32>
    %24 = vector.shape_cast %23 : vector<8xf32> to vector<8x1xf32>
    %25 = vector.broadcast %24 : vector<8x1xf32> to vector<8x8xf32>
    %26 = arith.subf %22, %25 : vector<8x8xf32>
    %27 = math.exp %26 : vector<8x8xf32>
    %cst_16 = arith.constant dense<0.000000e+00> : vector<8xf32>
    %28 = vector.multi_reduction <add>, %27, %cst_16 [1] : vector<8x8xf32> to vector<8xf32>
    %29 = vector.shape_cast %28 : vector<8xf32> to vector<8x1xf32>
    %30 = vector.broadcast %29 : vector<8x1xf32> to vector<8x8xf32>
    %31 = arith.divf %27, %30 : vector<8x8xf32>
    %c0_17 = arith.constant 0 : index
    %c0_18 = arith.constant 0 : index
    %32 = vector.load %arg7[%c0_17, %c0_18] : memref<8x8xf32, #tpu.memory_space<vmem>>, vector<8x8xf32>
    tpu.vector_store %arg7[%c0_17, %c0_18], %31 {strides = array<i32>} : memref<8x8xf32, #tpu.memory_space<vmem>>, vector<8x8xf32>,
    return
  }
  func.func @transform_0(%arg0: i32) -> (i32, i32) {
    %c0_i32 = arith.constant 0 : i32
    %c0_i32_0 = arith.constant 0 : i32
    return %arg0, %c0_i32 : i32, i32
  }
  func.func @transform_1(%arg0: i32) -> (i32, i32) {
    %c0_i32 = arith.constant 0 : i32
    %c0_i32_0 = arith.constant 0 : i32
    %c0_i32_1 = arith.constant 0 : i32
    return %c0_i32, %c0_i32_0 : i32, i32
  }
  func.func @transform_2(%arg0: i32) -> (i32, i32) {
    %c0_i32 = arith.constant 0 : i32
    %c0_i32_0 = arith.constant 0 : i32
    %c0_i32_1 = arith.constant 0 : i32
    return %c0_i32, %c0_i32_0 : i32, i32
  }
  func.func @transform_3(%arg0: i32) -> (i32, i32) {
    %c0_i32 = arith.constant 0 : i32
    %c0_i32_0 = arith.constant 0 : i32
    %c0_i32_1 = arith.constant 0 : i32
    return %c0_i32, %c0_i32_0 : i32, i32
  }
  func.func @transform_4(%arg0: i32) -> (i32, i32) {
    %c0_i32 = arith.constant 0 : i32
    %c0_i32_0 = arith.constant 0 : i32
    %c0_i32_1 = arith.constant 0 : i32
    return %c0_i32, %c0_i32_0 : i32, i32
  }
  func.func @transform_5(%arg0: i32) -> (i32, i32) {
    %c0_i32 = arith.constant 0 : i32
    %c0_i32_0 = arith.constant 0 : i32
    %c0_i32_1 = arith.constant 0 : i32
    return %c0_i32, %c0_i32_0 : i32, i32
  }
  func.func @transform_6(%arg0: i32) -> (i32, i32) {
    %c0_i32 = arith.constant 0 : i32
    %c0_i32_0 = arith.constant 0 : i32
    return %arg0, %c0_i32 : i32, i32
  }
}

</mosaic_0001>

<llo_original>
// kernel: ppo_actor_forward.1
$region0: #{ppo_actor_forward.1}
  #allocation0 [shape = 'u32[]', space=smem, size = 0x4, offset = 0x4, fixed_abs, tag = 'smem constant byte address 0x4 - core index']
  #allocation1 [shape = 'u32[144,128]{1,0:T(1,128)}', space=vmem, size = 0x12000, scoped, tag = 'internal scratch']
  %s0 = inlined_call_operand.vmem [shape: bf16[16,32], index: 0, kind: input, shape index: {}]
  %s1 = inlined_call_operand.vmem [shape: bf16[32,128], index: 1, kind: input, shape index: {}]
  %s2 = inlined_call_operand.vmem [shape: bf16[128,128], index: 2, kind: input, shape index: {}]
  %s3 = inlined_call_operand.vmem [shape: bf16[128,8], index: 3, kind: input, shape index: {}]
  %s4 = inlined_call_operand.vmem [shape: f32[2,128], index: 4, kind: input, shape index: {}]
  %s5 = inlined_call_operand.vmem [shape: f32[1,8], index: 5, kind: input, shape index: {}]
  %s6 = inlined_call_operand.vmem [shape: f32[16,8], index: 6, kind: output, shape index: {}]
  %s7 = sld [smem:[#allocation0]]
  $region57: #{ppo_actor_forward.1} parent=0
    _
  %s9 = ssub.s32 1, %s7
  %s10 = scalar_select 0, %s9, %s7
  loop: start=0, step=1, limit=4
  $region2: #{ppo_actor_forward.1} parent=0 // loop_pre_header
    _
  $region3: #{ppo_actor_forward.1} parent=0 // loop_header
    %s12 = sphi 0, %s16
    %p13 = scmp.ge.s32.totalorder %s12, 4
    %s22 = sphi 0, %s24
    %s25 = sphi 0, %s22
    %s26 = sphi 0, %s25
    %s42 = sphi 0, %s26
    %s46 = sphi 0, %s46
    %s48 = sphi 0, %s46
    %s49 = sphi 0, %s48
    %s63 = sphi 0, %s49
    %s67 = sphi 0, %s67
    %s69 = sphi 0, %s67
    %s70 = sphi 0, %s69
    %s84 = sphi 0, %s70
    %s88 = sphi 0, %s88
    %s90 = sphi 0, %s88
    %s91 = sphi 0, %s90
    %s105 = sphi 0, %s91
    %s109 = sphi 0, %s109
    %s111 = sphi 0, %s109
    %s112 = sphi 0, %s111
    %s126 = sphi 0, %s112
    %s130 = sphi 0, %s130
    %s132 = sphi 0, %s130
    %s133 = sphi 0, %s132
    %s147 = sphi 0, %s133
    %s153 = sphi 0, %s155
    %s156 = sphi 0, %s153
    %s157 = sphi 0, %s156
    %s173 = sphi 0, %s157
  $region4: #{ppo_actor_forward.1} parent=0 // loop_header_branch
    %15 = sbr.rel (%p13) target = $region8
  $region5: #{ppo_actor_forward.1} parent=0 // loop_body
    %s17 = ssub.s32 %s12, 1
    %s18 = ssub.s32 %s12, 2
    %s19 = sadd.s32 %s12, 1
    %s20 = ssub.s32 %s12, %s19
    %p21 = scmp.eq.s32.totalorder %s20, 0
    %s23 = sadd.s32 %s22, 1
    %s24 = scalar_select %p21, %s22, %s23
    %p27 = pneg %p21
    %p28 = scmp.eq.s32.totalorder %s12, 1
    %p29 = por %p27, %p28
    %p30 = scmp.ne.s32.totalorder %s22, %s25
    %p31 = scmp.eq.s32.totalorder %s12, 0
    %p32 = por %p30, %p31
    %p33 = scmp.ne.s32.totalorder %s22, %s25
    %p34 = scmp.eq.s32.totalorder %s17, 1
    %p35 = por %p33, %p34
    %p36 = scmp.ne.s32.totalorder %s25, %s26
    %p37 = scmp.eq.s32.totalorder %s17, 0
    %p38 = por %p36, %p37
    %p39 = scmp.ne.s32.totalorder %s25, %s26
    %p40 = scmp.eq.s32.totalorder %s18, 1
    %p41 = por %p39, %p40
    %p43 = scmp.ne.s32.totalorder %s26, %s42
    %p44 = scmp.eq.s32.totalorder %s18, 0
    %p45 = por %p43, %p44
    %s47 = sadd.s32 %s46, 1
    %p50 = scmp.eq.s32.totalorder %s12, 1
    %p51 = scmp.ne.s32.totalorder %s46, %s48
    %p52 = scmp.eq.s32.totalorder %s12, 0
    %p53 = por %p51, %p52
    %p54 = scmp.ne.s32.totalorder %s46, %s48
    %p55 = scmp.eq.s32.totalorder %s17, 1
    %p56 = por %p54, %p55
    %p57 = scmp.ne.s32.totalorder %s48, %s49
    %p58 = scmp.eq.s32.totalorder %s17, 0
    %p59 = por %p57, %p58
    %p60 = scmp.ne.s32.totalorder %s48, %s49
    %p61 = scmp.eq.s32.totalorder %s18, 1
    %p62 = por %p60, %p61
    %p64 = scmp.ne.s32.totalorder %s49, %s63
    %p65 = scmp.eq.s32.totalorder %s18, 0
    %p66 = por %p64, %p65
    %s68 = sadd.s32 %s67, 1
    %p71 = scmp.eq.s32.totalorder %s12, 1
    %p72 = scmp.ne.s32.totalorder %s67, %s69
    %p73 = scmp.eq.s32.totalorder %s12, 0
    %p74 = por %p72, %p73
    %p75 = scmp.ne.s32.totalorder %s67, %s69
    %p76 = scmp.eq.s32.totalorder %s17, 1
    %p77 = por %p75, %p76
    %p78 = scmp.ne.s32.totalorder %s69, %s70
    %p79 = scmp.eq.s32.totalorder %s17, 0
    %p80 = por %p78, %p79
    %p81 = scmp.ne.s32.totalorder %s69, %s70
    %p82 = scmp.eq.s32.totalorder %s18, 1
    %p83 = por %p81, %p82
    %p85 = scmp.ne.s32.totalorder %s70, %s84
    %p86 = scmp.eq.s32.totalorder %s18, 0
    %p87 = por %p85, %p86
    %s89 = sadd.s32 %s88, 1
    %p92 = scmp.eq.s32.totalorder %s12, 1
    %p93 = scmp.ne.s32.totalorder %s88, %s90
    %p94 = scmp.eq.s32.totalorder %s12, 0
    %p95 = por %p93, %p94
    %p96 = scmp.ne.s32.totalorder %s88, %s90
    %p97 = scmp.eq.s32.totalorder %s17, 1
    %p98 = por %p96, %p97
    %p99 = scmp.ne.s32.totalorder %s90, %s91
    %p100 = scmp.eq.s32.totalorder %s17, 0
    %p101 = por %p99, %p100
    %p102 = scmp.ne.s32.totalorder %s90, %s91
    %p103 = scmp.eq.s32.totalorder %s18, 1
    %p104 = por %p102, %p103
    %p106 = scmp.ne.s32.totalorder %s91, %s105
    %p107 = scmp.eq.s32.totalorder %s18, 0
    %p108 = por %p106, %p107
    %s110 = sadd.s32 %s109, 1
    %p113 = scmp.eq.s32.totalorder %s12, 1
    %p114 = scmp.ne.s32.totalorder %s109, %s111
    %p115 = scmp.eq.s32.totalorder %s12, 0
    %p116 = por %p114, %p115
    %p117 = scmp.ne.s32.totalorder %s109, %s111
    %p118 = scmp.eq.s32.totalorder %s17, 1
    %p119 = por %p117, %p118
    %p120 = scmp.ne.s32.totalorder %s111, %s112
    %p121 = scmp.eq.s32.totalorder %s17, 0
    %p122 = por %p120, %p121
    %p123 = scmp.ne.s32.totalorder %s111, %s112
    %p124 = scmp.eq.s32.totalorder %s18, 1
    %p125 = por %p123, %p124
    %p127 = scmp.ne.s32.totalorder %s112, %s126
    %p128 = scmp.eq.s32.totalorder %s18, 0
    %p129 = por %p127, %p128
    %s131 = sadd.s32 %s130, 1
    %p134 = scmp.eq.s32.totalorder %s12, 1
    %p135 = scmp.ne.s32.totalorder %s130, %s132
    %p136 = scmp.eq.s32.totalorder %s12, 0
    %p137 = por %p135, %p136
    %p138 = scmp.ne.s32.totalorder %s130, %s132
    %p139 = scmp.eq.s32.totalorder %s17, 1
    %p140 = por %p138, %p139
    %p141 = scmp.ne.s32.totalorder %s132, %s133
    %p142 = scmp.eq.s32.totalorder %s17, 0
    %p143 = por %p141, %p142
    %p144 = scmp.ne.s32.totalorder %s132, %s133
    %p145 = scmp.eq.s32.totalorder %s18, 1
    %p146 = por %p144, %p145
    %p148 = scmp.ne.s32.totalorder %s133, %s147
    %p149 = scmp.eq.s32.totalorder %s18, 0
    %p150 = por %p148, %p149
    %s151 = ssub.s32 %s12, %s19
    %p152 = scmp.eq.s32.totalorder %s151, 0
    %s154 = sadd.s32 %s153, 1
    %s155 = scalar_select %p152, %s153, %s154
    %p158 = pneg %p152
    %p159 = scmp.eq.s32.totalorder %s12, 1
    %p160 = por %p158, %p159
    %p161 = scmp.ne.s32.totalorder %s153, %s156
    %p162 = scmp.eq.s32.totalorder %s12, 0
    %p163 = por %p161, %p162
    %p164 = scmp.ne.s32.totalorder %s153, %s156
    %p165 = scmp.eq.s32.totalorder %s17, 1
    %p166 = por %p164, %p165
    %p167 = scmp.ne.s32.totalorder %s156, %s157
    %p168 = scmp.eq.s32.totalorder %s17, 0
    %p169 = por %p167, %p168
    %p170 = scmp.ne.s32.totalorder %s156, %s157
    %p171 = scmp.eq.s32.totalorder %s18, 1
    %p172 = por %p170, %p171
    %p174 = scmp.ne.s32.totalorder %s157, %s173
    %p175 = scmp.eq.s32.totalorder %s18, 0
    %p176 = por %p174, %p175
    %p177 = scmp.le.s32.totalorder 1, %s12
    %p178 = scmp.lt.s32.totalorder %s12, 3
    %p179 = pnand %p177, %p178
    %p180 = pneg %p179
    // Predicated region
    $region9: #{ppo_actor_forward.1} parent=5 // pred_check
      _
    $region10: #{ppo_actor_forward.1} parent=5 // pred_check_branch
      %182 = sbr.rel (%p179) target = $region12
    $region11: #{ppo_actor_forward.1} parent=5 // pred_region
      %s183 = ssub.s32 %s12, 1
      // Predicated region
      $region13: #{ppo_actor_forward.1} parent=11 // pred_check
        %p184 = pneg %p59
      $region14: #{ppo_actor_forward.1} parent=11 // pred_check_branch
        %186 = sbr.rel (%p184) target = $region16
      $region15: #{ppo_actor_forward.1} parent=11 // pred_region
        _
      $region16: #{ppo_actor_forward.1} parent=11 // pred_fallthru
        _
      // Predicated region
      $region17: #{ppo_actor_forward.1} parent=11 // pred_check
        %p187 = pneg %p80
      $region18: #{ppo_actor_forward.1} parent=11 // pred_check_branch
        %189 = sbr.rel (%p187) target = $region20
      $region19: #{ppo_actor_forward.1} parent=11 // pred_region
        _
      $region20: #{ppo_actor_forward.1} parent=11 // pred_fallthru
        _
      // Predicated region
      $region21: #{ppo_actor_forward.1} parent=11 // pred_check
        %p190 = pneg %p101
      $region22: #{ppo_actor_forward.1} parent=11 // pred_check_branch
        %192 = sbr.rel (%p190) target = $region24
      $region23: #{ppo_actor_forward.1} parent=11 // pred_region
        _
      $region24: #{ppo_actor_forward.1} parent=11 // pred_fallthru
        _
      // Predicated region
      $region25: #{ppo_actor_forward.1} parent=11 // pred_check
        %p193 = pneg %p122
      $region26: #{ppo_actor_forward.1} parent=11 // pred_check_branch
        %195 = sbr.rel (%p193) target = $region28
      $region27: #{ppo_actor_forward.1} parent=11 // pred_region
        _
      $region28: #{ppo_actor_forward.1} parent=11 // pred_fallthru
        _
      // Predicated region
      $region29: #{ppo_actor_forward.1} parent=11 // pred_check
        %p196 = pneg %p143
      $region30: #{ppo_actor_forward.1} parent=11 // pred_check_branch
        %198 = sbr.rel (%p196) target = $region32
      $region31: #{ppo_actor_forward.1} parent=11 // pred_region
        _
      $region32: #{ppo_actor_forward.1} parent=11 // pred_fallthru
        _
    $region12: #{ppo_actor_forward.1} parent=5 // pred_fallthru
      _
    %p199 = scmp.lt.s32.totalorder %s12, 2
    // Predicated region
    $region33: #{ppo_actor_forward.1} parent=5 // pred_check
      %p200 = pneg %p199
    $region34: #{ppo_actor_forward.1} parent=5 // pred_check_branch
      %202 = sbr.rel (%p200) target = $region36
    $region35: #{ppo_actor_forward.1} parent=5 // pred_region
      // Predicated region
      $region37: #{ppo_actor_forward.1} parent=35 // pred_check
        %p203 = pneg %p32
      $region38: #{ppo_actor_forward.1} parent=35 // pred_check_branch
        %205 = sbr.rel (%p203) target = $region40
      $region39: #{ppo_actor_forward.1} parent=35 // pred_region
        %p206 = scmp.lt.s32.totalorder %s12, 1
        %s207 = scalar_select %p206, %s12, 1
        %s208 = smul.addr %s207, 4
        %s209 = scalar_lea.vmem %s0, %s208
      $region40: #{ppo_actor_forward.1} parent=35 // pred_fallthru
        _
    $region36: #{ppo_actor_forward.1} parent=5 // pred_fallthru
      _
    %p210 = scmp.le.s32.totalorder 1, %s12
    %p211 = scmp.lt.s32.totalorder %s12, 3
    %p212 = pnand %p210, %p211
    %p213 = pneg %p212
    // Predicated region
    $region41: #{ppo_actor_forward.1} parent=5 // pred_check
      _
    $region42: #{ppo_actor_forward.1} parent=5 // pred_check_branch
      %215 = sbr.rel (%p212) target = $region44
    $region43: #{ppo_actor_forward.1} parent=5 // pred_region
      %s216 = ssub.s32 %s12, 1
      %p217 = scmp.lt.s32.totalorder %s17, 1
      %s218 = scalar_select %p217, %s17, 1
      %s219 = smul.addr %s218, 4
      %s220 = scalar_lea.vmem %s0, %s219
      %p221 = pneg %p38
      %p222 = pneg %p35
      %p223 = pneg %p59
      %p224 = pneg %p56
      %p225 = pneg %p80
      %p226 = pneg %p77
      %p227 = pneg %p101
      %p228 = pneg %p98
      %p229 = pneg %p122
      %p230 = pneg %p119
      %p231 = pneg %p143
      %p232 = pneg %p140
      %p233 = pneg %p169
      %p234 = pneg %p166
      %p235 = scmp.lt.s32.totalorder %s17, 1
      %s236 = scalar_select %p235, %s17, 1
      %s237 = smul.addr %s236, 8
      %s238 = scalar_lea.vmem %s6, %s237
      %p239 = scmp.lt.s32.totalorder %s17, 1
      %s240 = scalar_select %p239, %s17, 1
      %s241 = smul.addr %s240, 4
      %s242 = scalar_lea.vmem %s0, %s241
      %p243 = scmp.lt.s32.totalorder %s17, 1
      %s244 = scalar_select %p243, %s17, 1
      %s245 = smul.addr %s244, 8
      %s246 = scalar_lea.vmem %s6, %s245
      %v248 = vld [vmem:[%s242] sm:$0xf]
      %v249 = vld [vmem:[%s4] sm:$0x3]
      %v250 = vld [vmem:[%s1] sm:$0xf]
      %v251 = vld [vmem:[%s1 + $0x4] sm:$0xf]
      %v252 = vld [vmem:[%s1 + $0x8] sm:$0xf]
      %v253 = vld [vmem:[%s1 + $0xc] sm:$0xf]
      %v254 = vlaneseq
      %v255 = vshrl.u32 %v254, 7
      %v256 = vsub.s32 0, %v255
      %v257 = vrot.slane %v249, %v256
      %v262 = vunpack.c.l.b16 %v250
      %v263 = vunpack.c.l.b16 %v251
      %v264 = vunpack.c.l.b16 %v252
      %v265 = vunpack.c.l.b16 %v253
      %v266 = vpack.c.b16 %v263, %v262
      %v267 = vpack.c.b16 %v265, %v264
      %vm270 = vcmask 261120
      %v272 = vsel %vm270, %v248, 0
      %274 = vmatprep.subr.bf16.mxu0 0
      %275 = vmatpush1.bf16.msra.mxu0 0
      %276 = vmatprep.subr.bf16.mxu0 0
      %277 = vmatpush1.bf16.msra.mxu0 0
      %278 = vmatprep.subr.bf16.mxu0 0
      %279 = vmatpush1.bf16.msra.mxu0 0
      %280 = vmatprep.subr.bf16.mxu0 0
      %281 = vmatpush1.bf16.msra.mxu0 0
      %282 = vmatprep.subr.bf16.mxu0 0
      %283 = vmatpush1.bf16.msra.mxu0 0
      %284 = vmatprep.subr.bf16.mxu0 0
      %285 = vmatpush1.bf16.msra.mxu0 0
      %286 = vmatprep.subr.bf16.mxu0 0
      %287 = vmatpush1.bf16.msra.mxu0 %v267
      %288 = vmatprep.subr.bf16.mxu0 0
      %289 = vmatpush1.bf16.msra.mxu0 %v266
      %290 = vmatprep.subr.bf16.mxu0 0
      %291 = vmatpush2.bf16.msra.mxu0 0
      %292 = vmatprep.subr.bf16.mxu0 0
      %293 = vmatpush2.bf16.msra.mxu0 0
      %294 = vmatprep.subr.bf16.mxu0 0
      %295 = vmatpush2.bf16.msra.mxu0 0
      %296 = vmatprep.subr.bf16.mxu0 0
      %297 = vmatpush2.bf16.msra.mxu0 0
      %298 = vmatprep.subr.bf16.mxu0 0
      %299 = vmatpush2.bf16.msra.mxu0 0
      %300 = vmatprep.subr.bf16.mxu0 0
      %301 = vmatpush2.bf16.msra.mxu0 0
      %302 = vmatprep.subr.bf16.mxu0 0
      %303 = vmatpush2.bf16.msra.mxu0 0
      %304 = vmatprep.subr.bf16.mxu0 0
      %305 = vmatpush2.bf16.msra.mxu0 0
      %306 = vmatprep.mubr.bf16.mxu0 0
      %307 = vmatmul.mubr.bf16.gmra.mxu0 %v272
      %v308 = vpop.f32.mrf.mxu0
      %v309 = vadd.f32 %v257, %v308
      %v310 = vpop.f32.mrf.mxu0
      %v311 = vpop.f32.mrf.mxu0
      %v312 = vpop.f32.mrf.mxu0
      %313 = vdwg.mxu0
      %v314 = vmax.f32 %v309, 0.0
      %v315 = vpack.c.bf16 %v314, %v314
      %v316 = vld [vmem:[%s2] sm:$0xf]
      %v317 = vld [vmem:[%s2 + $0x4] sm:$0xf]
      %v318 = vld [vmem:[%s2 + $0x8] sm:$0xf]
      %v319 = vld [vmem:[%s2 + $0xc] sm:$0xf]
      %v320 = vld [vmem:[%s2 + $0x10] sm:$0xf]
      %v321 = vld [vmem:[%s2 + $0x14] sm:$0xf]
      %v322 = vld [vmem:[%s2 + $0x18] sm:$0xf]
      %v323 = vld [vmem:[%s2 + $0x1c] sm:$0xf]
      %v324 = vld [vmem:[%s2 + $0x20] sm:$0xf]
      %v325 = vld [vmem:[%s2 + $0x24] sm:$0xf]
      %v326 = vld [vmem:[%s2 + $0x28] sm:$0xf]
      %v327 = vld [vmem:[%s2 + $0x2c] sm:$0xf]
      %v328 = vld [vmem:[%s2 + $0x30] sm:$0xf]
      %v329 = vld [vmem:[%s2 + $0x34] sm:$0xf]
      %v330 = vld [vmem:[%s2 + $0x38] sm:$0xf]
      %v331 = vld [vmem:[%s2 + $0x3c] sm:$0xf]
      %v332 = vlaneseq
      %v333 = vshrl.u32 %v332, 7
      %v334 = vsub.s32 1, %v333
      %v335 = vrot.slane %v249, %v334
      %v352 = vunpack.c.l.b16 %v316
      %v353 = vunpack.c.l.b16 %v317
      %v354 = vunpack.c.l.b16 %v318
      %v355 = vunpack.c.l.b16 %v319
      %v356 = vunpack.c.l.b16 %v320
      %v357 = vunpack.c.l.b16 %v321
      %v358 = vunpack.c.l.b16 %v322
      %v359 = vunpack.c.l.b16 %v323
      %v360 = vunpack.c.l.b16 %v324
      %v361 = vunpack.c.l.b16 %v325
      %v362 = vunpack.c.l.b16 %v326
      %v363 = vunpack.c.l.b16 %v327
      %v364 = vunpack.c.l.b16 %v328
      %v365 = vunpack.c.l.b16 %v329
      %v366 = vunpack.c.l.b16 %v330
      %v367 = vunpack.c.l.b16 %v331
      %v368 = vpack.c.b16 %v353, %v352
      %v369 = vpack.c.b16 %v355, %v354
      %v370 = vpack.c.b16 %v357, %v356
      %v371 = vpack.c.b16 %v359, %v358
      %v372 = vpack.c.b16 %v361, %v360
      %v373 = vpack.c.b16 %v363, %v362
      %v374 = vpack.c.b16 %v365, %v364
      %v375 = vpack.c.b16 %v367, %v366
      %384 = vmatprep.subr.bf16.mxu0 0
      %385 = vmatpush1.bf16.msra.mxu0 %v375
      %386 = vmatprep.subr.bf16.mxu0 0
      %387 = vmatpush1.bf16.msra.mxu0 %v374
      %388 = vmatprep.subr.bf16.mxu0 0
      %389 = vmatpush1.bf16.msra.mxu0 %v373
      %390 = vmatprep.subr.bf16.mxu0 0
      %391 = vmatpush1.bf16.msra.mxu0 %v372
      %392 = vmatprep.subr.bf16.mxu0 0
      %393 = vmatpush1.bf16.msra.mxu0 %v371
      %394 = vmatprep.subr.bf16.mxu0 0
      %395 = vmatpush1.bf16.msra.mxu0 %v370
      %396 = vmatprep.subr.bf16.mxu0 0
      %397 = vmatpush1.bf16.msra.mxu0 %v369
      %398 = vmatprep.subr.bf16.mxu0 0
      %399 = vmatpush1.bf16.msra.mxu0 %v368
      %400 = vmatprep.subr.bf16.mxu0 0
      %401 = vmatpush2.bf16.msra.mxu0 0
      %402 = vmatprep.subr.bf16.mxu0 0
      %403 = vmatpush2.bf16.msra.mxu0 0
      %404 = vmatprep.subr.bf16.mxu0 0
      %405 = vmatpush2.bf16.msra.mxu0 0
      %406 = vmatprep.subr.bf16.mxu0 0
      %407 = vmatpush2.bf16.msra.mxu0 0
      %408 = vmatprep.subr.bf16.mxu0 0
      %409 = vmatpush2.bf16.msra.mxu0 0
      %410 = vmatprep.subr.bf16.mxu0 0
      %411 = vmatpush2.bf16.msra.mxu0 0
      %412 = vmatprep.subr.bf16.mxu0 0
      %413 = vmatpush2.bf16.msra.mxu0 0
      %414 = vmatprep.subr.bf16.mxu0 0
      %415 = vmatpush2.bf16.msra.mxu0 0
      %416 = vmatprep.mubr.bf16.mxu0 0
      %417 = vmatmul.mubr.bf16.gmra.mxu0 %v315
      %v418 = vpop.f32.mrf.mxu0
      %v419 = vadd.f32 %v335, %v418
      %v420 = vpop.f32.mrf.mxu0
      %v421 = vpop.f32.mrf.mxu0
      %v422 = vpop.f32.mrf.mxu0
      %423 = vdwg.mxu0
      %v424 = vmax.f32 %v419, 0.0
      %v425 = vpack.c.bf16 %v424, %v424
      %v426 = vld [vmem:[%s3] sm:$0xf]
      %v427 = vld [vmem:[%s3 + $0x4] sm:$0xf]
      %v428 = vld [vmem:[%s3 + $0x8] sm:$0xf]
      %v429 = vld [vmem:[%s3 + $0xc] sm:$0xf]
      %v430 = vld [vmem:[%s3 + $0x10] sm:$0xf]
      %v431 = vld [vmem:[%s3 + $0x14] sm:$0xf]
      %v432 = vld [vmem:[%s3 + $0x18] sm:$0xf]
      %v433 = vld [vmem:[%s3 + $0x1c] sm:$0xf]
      %v434 = vld [vmem:[%s3 + $0x20] sm:$0xf]
      %v435 = vld [vmem:[%s3 + $0x24] sm:$0xf]
      %v436 = vld [vmem:[%s3 + $0x28] sm:$0xf]
      %v437 = vld [vmem:[%s3 + $0x2c] sm:$0xf]
      %v438 = vld [vmem:[%s3 + $0x30] sm:$0xf]
      %v439 = vld [vmem:[%s3 + $0x34] sm:$0xf]
      %v440 = vld [vmem:[%s3 + $0x38] sm:$0xf]
      %v441 = vld [vmem:[%s3 + $0x3c] sm:$0xf]
      %v442 = vld [vmem:[%s5] sm:$0x1]
      %v444 = vlaneseq
      %v445 = vshrl.u32 %v444, 7
      %v446 = vsub.s32 0, %v445
      %v447 = vrot.slane %v442, %v446
      %v465 = vunpack.c.l.b16 %v426
      %v466 = vunpack.c.l.b16 %v427
      %v467 = vunpack.c.l.b16 %v428
      %v468 = vunpack.c.l.b16 %v429
      %v469 = vunpack.c.l.b16 %v430
      %v470 = vunpack.c.l.b16 %v431
      %v471 = vunpack.c.l.b16 %v432
      %v472 = vunpack.c.l.b16 %v433
      %v473 = vunpack.c.l.b16 %v434
      %v474 = vunpack.c.l.b16 %v435
      %v475 = vunpack.c.l.b16 %v436
      %v476 = vunpack.c.l.b16 %v437
      %v477 = vunpack.c.l.b16 %v438
      %v478 = vunpack.c.l.b16 %v439
      %v479 = vunpack.c.l.b16 %v440
      %v480 = vunpack.c.l.b16 %v441
      %v481 = vpack.c.b16 %v466, %v465
      %v482 = vpack.c.b16 %v468, %v467
      %v483 = vpack.c.b16 %v470, %v469
      %v484 = vpack.c.b16 %v472, %v471
      %v485 = vpack.c.b16 %v474, %v473
      %v486 = vpack.c.b16 %v476, %v475
      %v487 = vpack.c.b16 %v478, %v477
      %v488 = vpack.c.b16 %v480, %v479
      %497 = vmatprep.subr.bf16.mxu0 0
      %498 = vmatpush1.bf16.msra.mxu0 %v488
      %499 = vmatprep.subr.bf16.mxu0 0
      %500 = vmatpush1.bf16.msra.mxu0 %v487
      %501 = vmatprep.subr.bf16.mxu0 0
      %502 = vmatpush1.bf16.msra.mxu0 %v486
      %503 = vmatprep.subr.bf16.mxu0 0
      %504 = vmatpush1.bf16.msra.mxu0 %v485
      %505 = vmatprep.subr.bf16.mxu0 0
      %506 = vmatpush1.bf16.msra.mxu0 %v484
      %507 = vmatprep.subr.bf16.mxu0 0
      %508 = vmatpush1.bf16.msra.mxu0 %v483
      %509 = vmatprep.subr.bf16.mxu0 0
      %510 = vmatpush1.bf16.msra.mxu0 %v482
      %511 = vmatprep.subr.bf16.mxu0 0
      %512 = vmatpush1.bf16.msra.mxu0 %v481
      %513 = vmatprep.subr.bf16.mxu0 0
      %514 = vmatpush2.bf16.msra.mxu0 0
      %515 = vmatprep.subr.bf16.mxu0 0
      %516 = vmatpush2.bf16.msra.mxu0 0
      %517 = vmatprep.subr.bf16.mxu0 0
      %518 = vmatpush2.bf16.msra.mxu0 0
      %519 = vmatprep.subr.bf16.mxu0 0
      %520 = vmatpush2.bf16.msra.mxu0 0
      %521 = vmatprep.subr.bf16.mxu0 0
      %522 = vmatpush2.bf16.msra.mxu0 0
      %523 = vmatprep.subr.bf16.mxu0 0
      %524 = vmatpush2.bf16.msra.mxu0 0
      %525 = vmatprep.subr.bf16.mxu0 0
      %526 = vmatpush2.bf16.msra.mxu0 0
      %527 = vmatprep.subr.bf16.mxu0 0
      %528 = vmatpush2.bf16.msra.mxu0 0
      %529 = vmatprep.mubr.bf16.mxu0 0
      %530 = vmatmul.mubr.bf16.gmra.mxu0 %v425
      %v531 = vpop.f32.mrf.mxu0
      %v532 = vadd.f32 %v447, %v531
      %v533 = vpop.f32.mrf.mxu0
      %v534 = vpop.f32.mrf.mxu0
      %v535 = vpop.f32.mrf.mxu0
      %536 = vdwg.mxu0
      %vm537 = vcmask 64512
      %v538 = vsel %vm537, %v532, -inf
      %539 = vmax.xlane.f32.xlu0 %v538
      %v540 = vpop.xlane.xlu0 %539
      %v541 = vsub.f32 %v532, %v540
      %v542 = vmul.f32 %v541, 1.442695
      %v543 = vpow.pop %v542
      %v544 = vsel %vm537, %v543, 0.0
      %545 = vadd.xlane.f32.xlu0 %v544
      %v546 = vpop.xlane.xlu0 %545
      %v547 = vrcp.pop %v546
      %v548 = vmul.f32 %v543, %v547
      %549 = vst.msk [vmem:[%s246] sm:$0xff] %vm537, %v548
      %p550 = scmp.lt.s32.totalorder %s17, 1
      %s551 = scalar_select %p550, %s17, 1
      %s552 = smul.addr %s551, 8
      %s553 = scalar_lea.vmem %s6, %s552
      // Predicated region
      $region45: #{ppo_actor_forward.1} parent=43 // pred_check
        %p554 = pneg %p166
      $region46: #{ppo_actor_forward.1} parent=43 // pred_check_branch
        %556 = sbr.rel (%p554) target = $region48
      $region47: #{ppo_actor_forward.1} parent=43 // pred_region
        _
      $region48: #{ppo_actor_forward.1} parent=43 // pred_fallthru
        _
    $region44: #{ppo_actor_forward.1} parent=5 // pred_fallthru
      _
    %p557 = scmp.le.s32.totalorder 2, %s12
    // Predicated region
    $region49: #{ppo_actor_forward.1} parent=5 // pred_check
      %p558 = pneg %p557
    $region50: #{ppo_actor_forward.1} parent=5 // pred_check_branch
      %560 = sbr.rel (%p558) target = $region52
    $region51: #{ppo_actor_forward.1} parent=5 // pred_region
      %s561 = ssub.s32 %s12, 2
      // Predicated region
      $region53: #{ppo_actor_forward.1} parent=51 // pred_check
        %p562 = pneg %p172
      $region54: #{ppo_actor_forward.1} parent=51 // pred_check_branch
        %564 = sbr.rel (%p562) target = $region56
      $region55: #{ppo_actor_forward.1} parent=51 // pred_region
        %p565 = scmp.lt.s32.totalorder %s18, 1
        %s566 = scalar_select %p565, %s18, 1
        %s567 = smul.addr %s566, 8
        %s568 = scalar_lea.vmem %s6, %s567
      $region56: #{ppo_actor_forward.1} parent=51 // pred_fallthru
        _
    $region52: #{ppo_actor_forward.1} parent=5 // pred_fallthru
      _
  $region6: #{ppo_actor_forward.1} parent=0 // loop_footer
    %s16 = sadd.s32 1, %s12
  $region7: #{ppo_actor_forward.1} parent=0 // loop_footer_branch
    %11 = sbr.rel target = $region3
  $region8: #{ppo_actor_forward.1} parent=0 // loop_exit
    _

</llo_original>
